<compile_context>
chip_gen: v7x
topology: tpu7x:2x2x1
jax: 0.10.0
libtpu: 0.0.40
codegen_flags: <defaults>
</compile_context>

<pallas_src>
import functools

import jax
import jax.numpy as jnp
from jax import lax
from jax.experimental import pallas as pl
from jax.experimental.pallas import tpu as pltpu

_LANES = 128


def _partials_kernel(logits_ref, labels_ref, out_ref, *,
                     num_classes, hw, tile_p, n_inner):
    """Accumulate per-(batch, outer-chunk) partial statistics.

    logits_ref: (C, TP)  logits tile (channels on sublanes, pixels on lanes)
    labels_ref: (1, TP)  int32 class labels for the same pixels
    out_ref:    (1, 128) lane-packed f32 partials, resident across the inner
                         ("arbitrary") grid axis:
        lane 0             : sum_p [logsumexp_p - logit_p[true]]
        lane 1+3*(c-1)+0   : sum_p true_c * pred_c   (intersection)
        lane 1+3*(c-1)+1   : sum_p true_c            (true count)
        lane 1+3*(c-1)+2   : sum_p pred_c            (pred count)
    """
    C = num_classes
    TP = tile_p
    o = pl.program_id(1)
    t = pl.program_id(2)
    g = o * n_inner + t                       # global pixel-tile index

    # ---- valid-lane mask: partial tail tiles and ghost tiles (g past the
    # ---- last real tile, index-clamped in the index_map) contribute zero ----
    remaining = hw - g * TP                   # scalar int32 (may be <= 0)
    lane = lax.broadcasted_iota(jnp.int32, (1, TP), 1)
    valid = lane < remaining                  # (1, TP)
    valid_f = valid.astype(jnp.float32)

    # ---- load + sanitize (edge-block padding may hold garbage / NaN) ----
    logits = logits_ref[...].astype(jnp.float32)          # (C, TP)
    logits = jnp.where(valid, logits, 0.0)
    label = labels_ref[...]                                # (1, TP) int32
    label = jnp.clip(jnp.where(valid, label, 0), 0, C - 1)

    # ---- one-hot target built directly on lanes (no padded (TP, C) block) ----
    # TODO(synk): assumes hard integer labels (the torch module's argmax path);
    # soft labels would need the full probability tensor instead.
    ch = lax.broadcasted_iota(jnp.int32, (C, TP), 0)
    onehot_t = ((ch == label) & valid).astype(jnp.float32)   # (C, TP)

    # ---- hard prediction: first-max argmax over channels (strict '>') ----
    best = logits[0:1, :]
    bidx = jnp.zeros((1, TP), jnp.int32)
    for c in range(1, C):
        row = logits[c:c + 1, :]
        better = row > best
        best = jnp.where(better, row, best)
        bidx = jnp.where(better, c, bidx)
    pred_oh = ((ch == bidx) & valid).astype(jnp.float32)     # (C, TP)

    # ---- cross-entropy partial: sum_p [logsumexp_p - logit_p[true]] ----
    lse = best + jnp.log(jnp.sum(jnp.exp(logits - best), axis=0, keepdims=True))
    true_logit = jnp.sum(onehot_t * logits, axis=0, keepdims=True)          # (1, TP)
    ce_part = jnp.sum((lse - true_logit) * valid_f, axis=1, keepdims=True)  # (1, 1)

    # ---- dice statistics: per-class lane reductions over (C, TP) ----
    inter = jnp.sum(onehot_t * pred_oh, axis=1, keepdims=True)     # (C, 1)
    true_cnt = jnp.sum(onehot_t, axis=1, keepdims=True)            # (C, 1)
    pred_cnt = jnp.sum(pred_oh, axis=1, keepdims=True)             # (C, 1)

    # ---- pack the scalars into a lane-dense (1, 128) partial vector ----
    lane128 = lax.broadcasted_iota(jnp.int32, (1, _LANES), 1)
    packed = jnp.where(lane128 == 0, ce_part, 0.0)
    for c in range(1, C):
        base = 1 + 3 * (c - 1)
        packed = packed + jnp.where(lane128 == base, inter[c:c + 1, 0:1], 0.0)
        packed = packed + jnp.where(lane128 == base + 1, true_cnt[c:c + 1, 0:1], 0.0)
        packed = packed + jnp.where(lane128 == base + 2, pred_cnt[c:c + 1, 0:1], 0.0)

    # ---- accumulate into the resident per-(batch, outer) output block ----
    @pl.when(t == 0)
    def _init():
        out_ref[...] = jnp.zeros_like(out_ref)

    out_ref[...] += packed


def _pick_pixel_tile(hw, target):
    """Single full-extent tile if it fits the target, else a 128-multiple."""
    target = max(int(target), _LANES)
    if hw <= target:
        return hw                       # full-dim block is always layout-legal
    return (target // _LANES) * _LANES


def combined_loss(y_pred_nchw, y_true_nhwc, *, alpha=0.1, smooth=1e-6,
                  pixel_tile=32768):
    """alpha * CE(y_pred, argmax(y_true)) + (1 - alpha) * hard-argmax Dice.

    y_pred_nchw: (N, C, H, W) logits (any float dtype; cast to f32 on-chip).
    y_true_nhwc: (N, H, W, C) one-hot targets (argmax'd to labels, as in the
                 torch module's `y_true = torch.argmax(y_true, dim=-1)`).
    """
    N, C, H, W = y_pred_nchw.shape
    assert y_true_nhwc.shape == (N, H, W, C)
    assert 1 + 3 * (C - 1) <= _LANES, "too many classes for the lane packing"
    HW = H * W

    tile_p = _pick_pixel_tile(HW, pixel_tile)
    num_tiles = (HW + tile_p - 1) // tile_p
    n_outer = 2 if num_tiles >= 2 else 1          # v7x megacore coverage
    n_inner = (num_tiles + n_outer - 1) // n_outer

    # Free reshapes only; the one-hot -> label argmax mirrors the module spec.
    logits = y_pred_nchw.reshape(N, C, HW)
    labels = jnp.argmax(y_true_nhwc, axis=-1).astype(jnp.int32).reshape(N, 1, HW)

    def _tile_idx(o, t):
        # Clamp ghost tiles (when num_tiles % n_outer != 0) onto the last real
        # block; their contribution is masked to zero inside the kernel.
        return jnp.minimum(o * n_inner + t, num_tiles - 1)

    kernel = functools.partial(_partials_kernel, num_classes=C, hw=HW,
                               tile_p=tile_p, n_inner=n_inner)
    partials = pl.pallas_call(
        kernel,
        out_shape=jax.ShapeDtypeStruct((N * n_outer, 1, _LANES), jnp.float32),
        grid=(N, n_outer, n_inner),
        in_specs=[
            pl.BlockSpec((None, C, tile_p),
                         lambda n, o, t: (n, 0, _tile_idx(o, t))),
            pl.BlockSpec((None, 1, tile_p),
                         lambda n, o, t: (n, 0, _tile_idx(o, t))),
        ],
        out_specs=pl.BlockSpec((None, 1, _LANES),
                               lambda n, o, t: (n * n_outer + o, 0, 0)),
        compiler_params=pltpu.CompilerParams(
            dimension_semantics=("parallel", "parallel", "arbitrary")),
    )(logits, labels)

    # Tiny scalar epilogue: combine the per-(batch, outer-chunk) partials.
    tot = jnp.sum(partials, axis=(0, 1))                  # (128,)
    ce = tot[0] / jnp.float32(N * HW)
    dice_total = jnp.float32(0.0)
    for c in range(1, C):
        base = 1 + 3 * (c - 1)
        inter, t_cnt, p_cnt = tot[base], tot[base + 1], tot[base + 2]
        dice_total = dice_total + (2.0 * inter + smooth) / (t_cnt + p_cnt + smooth)
    dice = 1.0 - dice_total / (C - 1)
    return alpha * ce + (1.0 - alpha) * dice


def _reference_loss(y_pred_nchw, y_true_nhwc, *, alpha=0.1, smooth=1e-6):
    """Pure-JAX reference mirroring the PyTorch module."""
    C = y_pred_nchw.shape[1]
    label = jnp.argmax(y_true_nhwc, axis=-1)                       # (N, H, W)
    label = jnp.clip(label, 0, C - 1)
    logits = jnp.moveaxis(y_pred_nchw.astype(jnp.float32), 1, -1)  # (N,H,W,C)
    log_p = jax.nn.log_softmax(logits, axis=-1)
    ce = -jnp.mean(jnp.take_along_axis(log_p, label[..., None], axis=-1))
    pred = jnp.argmax(logits, axis=-1)
    total = 0.0
    for i in range(1, C):
        t_c = (label == i).astype(jnp.float32)
        p_c = (pred == i).astype(jnp.float32)
        inter = jnp.sum(t_c * p_c)
        denom = jnp.sum(t_c) + jnp.sum(p_c)
        total = total + (2.0 * inter + smooth) / (denom + smooth)
    dice = 1.0 - total / (C - 1)
    return alpha * ce + (1.0 - alpha) * dice


if __name__ == "__main__":
    key = jax.random.PRNGKey(0)
    k1, k2, k3, k4 = jax.random.split(key, 4)

    # Case 1: canonical small shape (single full-extent pixel tile).
    N, C, H, W = 2, 4, 16, 16
    y_pred = jax.random.normal(k1, (N, C, H, W), dtype=jnp.float32)
    labels = jax.random.randint(k2, (N, H, W), 0, C)
    y_true = jax.nn.one_hot(labels, C, dtype=jnp.float32)
    loss = jax.block_until_ready(combined_loss(y_pred, y_true))
    ref = _reference_loss(y_pred, y_true)
    assert jnp.allclose(loss, ref, atol=1e-5, rtol=1e-5), (loss, ref)

    # Case 2: non-divisible spatial size with a forced small tile -> exercises
    # the masked tail, the clamped ghost tile, and the 2-way outer split.
    N2, C2, H2, W2 = 2, 4, 15, 20
    y_pred2 = jax.random.normal(k3, (N2, C2, H2, W2), dtype=jnp.float32)
    labels2 = jax.random.randint(k4, (N2, H2, W2), 0, C2)
    y_true2 = jax.nn.one_hot(labels2, C2, dtype=jnp.float32)
    loss2 = jax.block_until_ready(
        combined_loss(y_pred2, y_true2, pixel_tile=128))
    ref2 = _reference_loss(y_pred2, y_true2)
    assert jnp.allclose(loss2, ref2, atol=1e-5, rtol=1e-5), (loss2, ref2)

    print("KERNEL_OK")
</pallas_src>

<mosaic_0001>
module attributes {stable_mosaic.version = 11 : i64} {
  func.func @_partials_kernel(%arg0: i32, %arg1: i32, %arg2: i32, %arg3: memref<1x4x256xf32, #tpu.memory_space<vmem>>, %arg4: memref<1x1x256xi32, #tpu.memory_space<vmem>>, %arg5: memref<1x1x128xf32, #tpu.memory_space<vmem>>) attributes {dimension_semantics = [#tpu.dimension_semantics<parallel>, #tpu.dimension_semantics<parallel>, #tpu.dimension_semantics<arbitrary>], iteration_bounds = array<i64: 2, 1, 1>, scalar_prefetch = 0 : i64, scratch_operands = 0 : i64, tpu.core_type = #tpu.core_type<tc>, window_params = [{transform_indices = @transform_0, window_bounds = array<i64: 1, 4, 256>}, {transform_indices = @transform_1, window_bounds = array<i64: 1, 1, 256>}, {transform_indices = @transform_2, window_bounds = array<i64: 1, 1, 128>}]} {
    %c1_i32 = arith.constant 1 : i32
    %0 = arith.muli %arg1, %c1_i32 : i32
    %1 = arith.addi %0, %arg2 : i32
    %c256_i32 = arith.constant 256 : i32
    %2 = arith.muli %1, %c256_i32 : i32
    %c256_i32_0 = arith.constant 256 : i32
    %3 = arith.subi %c256_i32_0, %2 : i32
    %4 = tpu.iota {dimensions = array<i32: 1>} : vector<1x256xi32>
    %5 = vector.broadcast %3 : i32 to vector<1x256xi32>
    %6 = arith.cmpi slt, %4, %5 : vector<1x256xi32>
    %7 = arith.extui %6 : vector<1x256xi1> to vector<1x256xi32>
    %8 = arith.sitofp %7 : vector<1x256xi32> to vector<1x256xf32>
    %c0 = arith.constant 0 : index
    %c0_1 = arith.constant 0 : index
    %c0_2 = arith.constant 0 : index
    %9 = vector.load %arg3[%c0, %c0_1, %c0_2] : memref<1x4x256xf32, #tpu.memory_space<vmem>>, vector<1x4x256xf32>
    %10 = vector.shape_cast %9 : vector<1x4x256xf32> to vector<4x256xf32>
    %cst = arith.constant 0.000000e+00 : f32
    %11 = vector.shape_cast %6 : vector<1x256xi1> to vector<1x256xi1>
    %12 = vector.broadcast %11 : vector<1x256xi1> to vector<4x256xi1>
    %13 = vector.broadcast %cst : f32 to vector<4x256xf32>
    %14 = arith.select %12, %10, %13 : vector<4x256xi1>, vector<4x256xf32>
    %c0_3 = arith.constant 0 : index
    %c0_4 = arith.constant 0 : index
    %c0_5 = arith.constant 0 : index
    %15 = vector.load %arg4[%c0_3, %c0_4, %c0_5] : memref<1x1x256xi32, #tpu.memory_space<vmem>>, vector<1x1x256xi32>
    %16 = vector.shape_cast %15 : vector<1x1x256xi32> to vector<1x256xi32>
    %c0_i32 = arith.constant 0 : i32
    %17 = vector.broadcast %c0_i32 : i32 to vector<1x256xi32>
    %18 = arith.select %6, %16, %17 : vector<1x256xi1>, vector<1x256xi32>
    %c0_i32_6 = arith.constant 0 : i32
    %c3_i32 = arith.constant 3 : i32
    %19 = vector.broadcast %c0_i32_6 : i32 to vector<1x256xi32>
    %20 = arith.maxsi %19, %18 : vector<1x256xi32>
    %21 = vector.broadcast %c3_i32 : i32 to vector<1x256xi32>
    %22 = arith.minsi %21, %20 : vector<1x256xi32>
    %23 = tpu.iota {dimensions = array<i32: 0>} : vector<4x256xi32>
    %24 = vector.broadcast %22 : vector<1x256xi32> to vector<4x256xi32>
    %25 = arith.cmpi eq, %23, %24 : vector<4x256xi32>
    %26 = vector.broadcast %6 : vector<1x256xi1> to vector<4x256xi1>
    %27 = arith.andi %25, %26 : vector<4x256xi1>
    %28 = arith.extui %27 : vector<4x256xi1> to vector<4x256xi32>
    %29 = arith.sitofp %28 : vector<4x256xi32> to vector<4x256xf32>
    %30 = vector.extract_strided_slice %14 {offsets = [0, 0], sizes = [1, 256], strides = [1, 1]} : vector<4x256xf32> to vector<1x256xf32>
    %c0_i32_7 = arith.constant 0 : i32
    %31 = vector.broadcast %c0_i32_7 : i32 to vector<1x256xi32>
    %32 = vector.extract_strided_slice %14 {offsets = [1, 0], sizes = [1, 256], strides = [1, 1]} : vector<4x256xf32> to vector<1x256xf32>
    %33 = arith.cmpf ogt, %32, %30 : vector<1x256xf32>
    %34 = arith.select %33, %32, %30 : vector<1x256xi1>, vector<1x256xf32>
    %c1_i32_8 = arith.constant 1 : i32
    %35 = vector.broadcast %c1_i32_8 : i32 to vector<1x256xi32>
    %36 = arith.select %33, %35, %31 : vector<1x256xi1>, vector<1x256xi32>
    %37 = vector.extract_strided_slice %14 {offsets = [2, 0], sizes = [1, 256], strides = [1, 1]} : vector<4x256xf32> to vector<1x256xf32>
    %38 = arith.cmpf ogt, %37, %34 : vector<1x256xf32>
    %39 = arith.select %38, %37, %34 : vector<1x256xi1>, vector<1x256xf32>
    %c2_i32 = arith.constant 2 : i32
    %40 = vector.broadcast %c2_i32 : i32 to vector<1x256xi32>
    %41 = arith.select %38, %40, %36 : vector<1x256xi1>, vector<1x256xi32>
    %42 = vector.extract_strided_slice %14 {offsets = [3, 0], sizes = [1, 256], strides = [1, 1]} : vector<4x256xf32> to vector<1x256xf32>
    %43 = arith.cmpf ogt, %42, %39 : vector<1x256xf32>
    %44 = arith.select %43, %42, %39 : vector<1x256xi1>, vector<1x256xf32>
    %c3_i32_9 = arith.constant 3 : i32
    %45 = vector.broadcast %c3_i32_9 : i32 to vector<1x256xi32>
    %46 = arith.select %43, %45, %41 : vector<1x256xi1>, vector<1x256xi32>
    %47 = vector.broadcast %46 : vector<1x256xi32> to vector<4x256xi32>
    %48 = arith.cmpi eq, %23, %47 : vector<4x256xi32>
    %49 = vector.broadcast %6 : vector<1x256xi1> to vector<4x256xi1>
    %50 = arith.andi %48, %49 : vector<4x256xi1>
    %51 = arith.extui %50 : vector<4x256xi1> to vector<4x256xi32>
    %52 = arith.sitofp %51 : vector<4x256xi32> to vector<4x256xf32>
    %53 = vector.broadcast %44 : vector<1x256xf32> to vector<4x256xf32>
    %54 = arith.subf %14, %53 : vector<4x256xf32>
    %55 = math.exp %54 : vector<4x256xf32>
    %cst_10 = arith.constant dense<0.000000e+00> : vector<256xf32>
    %56 = vector.multi_reduction <add>, %55, %cst_10 [0] : vector<4x256xf32> to vector<256xf32>
    %57 = vector.shape_cast %56 : vector<256xf32> to vector<1x256xf32>
    %58 = math.log %57 : vector<1x256xf32>
    %59 = arith.addf %44, %58 : vector<1x256xf32>
    %60 = arith.mulf %29, %14 : vector<4x256xf32>
    %cst_11 = arith.constant dense<0.000000e+00> : vector<256xf32>
    %61 = vector.multi_reduction <add>, %60, %cst_11 [0] : vector<4x256xf32> to vector<256xf32>
    %62 = vector.shape_cast %61 : vector<256xf32> to vector<1x256xf32>
    %63 = arith.subf %59, %62 : vector<1x256xf32>
    %64 = arith.mulf %63, %8 : vector<1x256xf32>
    %cst_12 = arith.constant dense<0.000000e+00> : vector<1xf32>
    %65 = vector.multi_reduction <add>, %64, %cst_12 [1] : vector<1x256xf32> to vector<1xf32>
    %66 = vector.shape_cast %65 : vector<1xf32> to vector<1x1xf32>
    %67 = arith.mulf %29, %52 : vector<4x256xf32>
    %cst_13 = arith.constant dense<0.000000e+00> : vector<4xf32>
    %68 = vector.multi_reduction <add>, %67, %cst_13 [1] : vector<4x256xf32> to vector<4xf32>
    %69 = vector.shape_cast %68 : vector<4xf32> to vector<4x1xf32>
    %cst_14 = arith.constant dense<0.000000e+00> : vector<4xf32>
    %70 = vector.multi_reduction <add>, %29, %cst_14 [1] : vector<4x256xf32> to vector<4xf32>
    %71 = vector.shape_cast %70 : vector<4xf32> to vector<4x1xf32>
    %cst_15 = arith.constant dense<0.000000e+00> : vector<4xf32>
    %72 = vector.multi_reduction <add>, %52, %cst_15 [1] : vector<4x256xf32> to vector<4xf32>
    %73 = vector.shape_cast %72 : vector<4xf32> to vector<4x1xf32>
    %74 = tpu.iota {dimensions = array<i32: 1>} : vector<1x128xi32>
    %c0_i32_16 = arith.constant 0 : i32
    %75 = vector.broadcast %c0_i32_16 : i32 to vector<1x128xi32>
    %76 = arith.cmpi eq, %74, %75 : vector<1x128xi32>
    %cst_17 = arith.constant 0.000000e+00 : f32
    %77 = vector.shape_cast %66 : vector<1x1xf32> to vector<1x1xf32>
    %78 = vector.broadcast %77 : vector<1x1xf32> to vector<1x128xf32>
    %79 = vector.broadcast %cst_17 : f32 to vector<1x128xf32>
    %80 = arith.select %76, %78, %79 : vector<1x128xi1>, vector<1x128xf32>
    %c1_i32_18 = arith.constant 1 : i32
    %81 = vector.broadcast %c1_i32_18 : i32 to vector<1x128xi32>
    %82 = arith.cmpi eq, %74, %81 : vector<1x128xi32>
    %83 = vector.extract_strided_slice %69 {offsets = [1, 0], sizes = [1, 1], strides = [1, 1]} : vector<4x1xf32> to vector<1x1xf32>
    %cst_19 = arith.constant 0.000000e+00 : f32
    %84 = vector.shape_cast %83 : vector<1x1xf32> to vector<1x1xf32>
    %85 = vector.broadcast %84 : vector<1x1xf32> to vector<1x128xf32>
    %86 = vector.broadcast %cst_19 : f32 to vector<1x128xf32>
    %87 = arith.select %82, %85, %86 : vector<1x128xi1>, vector<1x128xf32>
    %88 = arith.addf %80, %87 : vector<1x128xf32>
    %c2_i32_20 = arith.constant 2 : i32
    %89 = vector.broadcast %c2_i32_20 : i32 to vector<1x128xi32>
    %90 = arith.cmpi eq, %74, %89 : vector<1x128xi32>
    %91 = vector.extract_strided_slice %71 {offsets = [1, 0], sizes = [1, 1], strides = [1, 1]} : vector<4x1xf32> to vector<1x1xf32>
    %cst_21 = arith.constant 0.000000e+00 : f32
    %92 = vector.shape_cast %91 : vector<1x1xf32> to vector<1x1xf32>
    %93 = vector.broadcast %92 : vector<1x1xf32> to vector<1x128xf32>
    %94 = vector.broadcast %cst_21 : f32 to vector<1x128xf32>
    %95 = arith.select %90, %93, %94 : vector<1x128xi1>, vector<1x128xf32>
    %96 = arith.addf %88, %95 : vector<1x128xf32>
    %c3_i32_22 = arith.constant 3 : i32
    %97 = vector.broadcast %c3_i32_22 : i32 to vector<1x128xi32>
    %98 = arith.cmpi eq, %74, %97 : vector<1x128xi32>
    %99 = vector.extract_strided_slice %73 {offsets = [1, 0], sizes = [1, 1], strides = [1, 1]} : vector<4x1xf32> to vector<1x1xf32>
    %cst_23 = arith.constant 0.000000e+00 : f32
    %100 = vector.shape_cast %99 : vector<1x1xf32> to vector<1x1xf32>
    %101 = vector.broadcast %100 : vector<1x1xf32> to vector<1x128xf32>
    %102 = vector.broadcast %cst_23 : f32 to vector<1x128xf32>
    %103 = arith.select %98, %101, %102 : vector<1x128xi1>, vector<1x128xf32>
    %104 = arith.addf %96, %103 : vector<1x128xf32>
    %c4_i32 = arith.constant 4 : i32
    %105 = vector.broadcast %c4_i32 : i32 to vector<1x128xi32>
    %106 = arith.cmpi eq, %74, %105 : vector<1x128xi32>
    %107 = vector.extract_strided_slice %69 {offsets = [2, 0], sizes = [1, 1], strides = [1, 1]} : vector<4x1xf32> to vector<1x1xf32>
    %cst_24 = arith.constant 0.000000e+00 : f32
    %108 = vector.shape_cast %107 : vector<1x1xf32> to vector<1x1xf32>
    %109 = vector.broadcast %108 : vector<1x1xf32> to vector<1x128xf32>
    %110 = vector.broadcast %cst_24 : f32 to vector<1x128xf32>
    %111 = arith.select %106, %109, %110 : vector<1x128xi1>, vector<1x128xf32>
    %112 = arith.addf %104, %111 : vector<1x128xf32>
    %c5_i32 = arith.constant 5 : i32
    %113 = vector.broadcast %c5_i32 : i32 to vector<1x128xi32>
    %114 = arith.cmpi eq, %74, %113 : vector<1x128xi32>
    %115 = vector.extract_strided_slice %71 {offsets = [2, 0], sizes = [1, 1], strides = [1, 1]} : vector<4x1xf32> to vector<1x1xf32>
    %cst_25 = arith.constant 0.000000e+00 : f32
    %116 = vector.shape_cast %115 : vector<1x1xf32> to vector<1x1xf32>
    %117 = vector.broadcast %116 : vector<1x1xf32> to vector<1x128xf32>
    %118 = vector.broadcast %cst_25 : f32 to vector<1x128xf32>
    %119 = arith.select %114, %117, %118 : vector<1x128xi1>, vector<1x128xf32>
    %120 = arith.addf %112, %119 : vector<1x128xf32>
    %c6_i32 = arith.constant 6 : i32
    %121 = vector.broadcast %c6_i32 : i32 to vector<1x128xi32>
    %122 = arith.cmpi eq, %74, %121 : vector<1x128xi32>
    %123 = vector.extract_strided_slice %73 {offsets = [2, 0], sizes = [1, 1], strides = [1, 1]} : vector<4x1xf32> to vector<1x1xf32>
    %cst_26 = arith.constant 0.000000e+00 : f32
    %124 = vector.shape_cast %123 : vector<1x1xf32> to vector<1x1xf32>
    %125 = vector.broadcast %124 : vector<1x1xf32> to vector<1x128xf32>
    %126 = vector.broadcast %cst_26 : f32 to vector<1x128xf32>
    %127 = arith.select %122, %125, %126 : vector<1x128xi1>, vector<1x128xf32>
    %128 = arith.addf %120, %127 : vector<1x128xf32>
    %c7_i32 = arith.constant 7 : i32
    %129 = vector.broadcast %c7_i32 : i32 to vector<1x128xi32>
    %130 = arith.cmpi eq, %74, %129 : vector<1x128xi32>
    %131 = vector.extract_strided_slice %69 {offsets = [3, 0], sizes = [1, 1], strides = [1, 1]} : vector<4x1xf32> to vector<1x1xf32>
    %cst_27 = arith.constant 0.000000e+00 : f32
    %132 = vector.shape_cast %131 : vector<1x1xf32> to vector<1x1xf32>
    %133 = vector.broadcast %132 : vector<1x1xf32> to vector<1x128xf32>
    %134 = vector.broadcast %cst_27 : f32 to vector<1x128xf32>
    %135 = arith.select %130, %133, %134 : vector<1x128xi1>, vector<1x128xf32>
    %136 = arith.addf %128, %135 : vector<1x128xf32>
    %c8_i32 = arith.constant 8 : i32
    %137 = vector.broadcast %c8_i32 : i32 to vector<1x128xi32>
    %138 = arith.cmpi eq, %74, %137 : vector<1x128xi32>
    %139 = vector.extract_strided_slice %71 {offsets = [3, 0], sizes = [1, 1], strides = [1, 1]} : vector<4x1xf32> to vector<1x1xf32>
    %cst_28 = arith.constant 0.000000e+00 : f32
    %140 = vector.shape_cast %139 : vector<1x1xf32> to vector<1x1xf32>
    %141 = vector.broadcast %140 : vector<1x1xf32> to vector<1x128xf32>
    %142 = vector.broadcast %cst_28 : f32 to vector<1x128xf32>
    %143 = arith.select %138, %141, %142 : vector<1x128xi1>, vector<1x128xf32>
    %144 = arith.addf %136, %143 : vector<1x128xf32>
    %c9_i32 = arith.constant 9 : i32
    %145 = vector.broadcast %c9_i32 : i32 to vector<1x128xi32>
    %146 = arith.cmpi eq, %74, %145 : vector<1x128xi32>
    %147 = vector.extract_strided_slice %73 {offsets = [3, 0], sizes = [1, 1], strides = [1, 1]} : vector<4x1xf32> to vector<1x1xf32>
    %cst_29 = arith.constant 0.000000e+00 : f32
    %148 = vector.shape_cast %147 : vector<1x1xf32> to vector<1x1xf32>
    %149 = vector.broadcast %148 : vector<1x1xf32> to vector<1x128xf32>
    %150 = vector.broadcast %cst_29 : f32 to vector<1x128xf32>
    %151 = arith.select %146, %149, %150 : vector<1x128xi1>, vector<1x128xf32>
    %152 = arith.addf %144, %151 : vector<1x128xf32>
    %c0_i32_30 = arith.constant 0 : i32
    %153 = arith.cmpi eq, %arg2, %c0_i32_30 : i32
    %154 = arith.extui %153 : i1 to i32
    %c0_i32_31 = arith.constant 0 : i32
    %155 = arith.cmpi ne, %154, %c0_i32_31 : i32
    scf.if %155 {
      %cst_38 = arith.constant 0.000000e+00 : f32
      %162 = vector.broadcast %cst_38 : f32 to vector<1x128xf32>
      %c0_39 = arith.constant 0 : index
      %c0_40 = arith.constant 0 : index
      %c0_41 = arith.constant 0 : index
      %163 = vector.load %arg5[%c0_39, %c0_40, %c0_41] : memref<1x1x128xf32, #tpu.memory_space<vmem>>, vector<1x1x128xf32>
      %164 = vector.shape_cast %163 : vector<1x1x128xf32> to vector<1x128xf32>
      %165 = vector.shape_cast %162 : vector<1x128xf32> to vector<1x1x128xf32>
      tpu.vector_store %arg5[%c0_39, %c0_40, %c0_41], %165 {strides = array<i32>} : memref<1x1x128xf32, #tpu.memory_space<vmem>>, vector<1x1x128xf32>,
    } else {
    }
    %c0_32 = arith.constant 0 : index
    %c0_33 = arith.constant 0 : index
    %c0_34 = arith.constant 0 : index
    %156 = vector.load %arg5[%c0_32, %c0_33, %c0_34] : memref<1x1x128xf32, #tpu.memory_space<vmem>>, vector<1x1x128xf32>
    %157 = vector.shape_cast %156 : vector<1x1x128xf32> to vector<1x128xf32>
    %158 = arith.addf %157, %152 : vector<1x128xf32>
    %c0_35 = arith.constant 0 : index
    %c0_36 = arith.constant 0 : index
    %c0_37 = arith.constant 0 : index
    %159 = vector.load %arg5[%c0_35, %c0_36, %c0_37] : memref<1x1x128xf32, #tpu.memory_space<vmem>>, vector<1x1x128xf32>
    %160 = vector.shape_cast %159 : vector<1x1x128xf32> to vector<1x128xf32>
    %161 = vector.shape_cast %158 : vector<1x128xf32> to vector<1x1x128xf32>
    tpu.vector_store %arg5[%c0_35, %c0_36, %c0_37], %161 {strides = array<i32>} : memref<1x1x128xf32, #tpu.memory_space<vmem>>, vector<1x1x128xf32>,
    return
  }
  func.func @transform_0(%arg0: i32, %arg1: i32, %arg2: i32) -> (i32, i32, i32) {
    %c1_i32 = arith.constant 1 : i32
    %0 = arith.muli %arg1, %c1_i32 : i32
    %1 = arith.addi %0, %arg2 : i32
    %c0_i32 = arith.constant 0 : i32
    %2 = arith.minsi %1, %c0_i32 : i32
    %c0_i32_0 = arith.constant 0 : i32
    %c0_i32_1 = arith.constant 0 : i32
    return %arg0, %c0_i32_0, %2 : i32, i32, i32
  }
  func.func @transform_1(%arg0: i32, %arg1: i32, %arg2: i32) -> (i32, i32, i32) {
    %c1_i32 = arith.constant 1 : i32
    %0 = arith.muli %arg1, %c1_i32 : i32
    %1 = arith.addi %0, %arg2 : i32
    %c0_i32 = arith.constant 0 : i32
    %2 = arith.minsi %1, %c0_i32 : i32
    %c0_i32_0 = arith.constant 0 : i32
    %c0_i32_1 = arith.constant 0 : i32
    return %arg0, %c0_i32_0, %2 : i32, i32, i32
  }
  func.func @transform_2(%arg0: i32, %arg1: i32, %arg2: i32) -> (i32, i32, i32) {
    %c1_i32 = arith.constant 1 : i32
    %0 = arith.muli %arg0, %c1_i32 : i32
    %1 = arith.addi %0, %arg1 : i32
    %c0_i32 = arith.constant 0 : i32
    %c0_i32_0 = arith.constant 0 : i32
    %c0_i32_1 = arith.constant 0 : i32
    return %1, %c0_i32, %c0_i32_0 : i32, i32, i32
  }
}

</mosaic_0001>

<llo_original>
// kernel: tpu_custom_call.1
$region0: #{tpu_custom_call.1}
  #allocation0 [shape = 'u32[]', space=smem, size = 0x4, offset = 0x4, fixed_abs, tag = 'smem constant byte address 0x4 - core index']
  #allocation1 [shape = 'u32[144,128]{1,0:T(1,128)}', space=vmem, size = 0x12000, scoped, tag = 'internal scratch']
  %s0 = inlined_call_operand.hbm [shape: f32[2,4,256], index: 0, kind: input, shape index: {}]
  %s1 = inlined_call_operand.hbm [shape: s32[2,1,256], index: 1, kind: input, shape index: {}]
  %s2 = inlined_call_operand.hbm [shape: f32[2,1,128], index: 2, kind: output, shape index: {}]
  %s3 = sld [smem:[#allocation0]]
  $region53: #{tpu_custom_call.1} parent=0
    _
  %s5 = ssub.s32 1, %s3
  %s6 = scalar_select 0, %s5, %s3
  $region1: #{tpu_custom_call.1} parent=0
    #allocation2 [shape = 'u8[8192]{0}', space=vmem, size = 0x2000, scoped, tag = 'input window, operand 0']
    #allocation3 [shape = 's32[2]{0}', space=sflag, size = 0x8, scoped, tag = 'scoped memory for tpu_custom_call.1']
    #allocation4 [shape = 's32[2]{0}', space=sflag, size = 0x8, scoped, tag = 'scoped memory for tpu_custom_call.1']
    #allocation5 [shape = 'u8[2048]{0}', space=vmem, size = 0x800, scoped, tag = 'input window, operand 1']
    #allocation6 [shape = 's32[2]{0}', space=sflag, size = 0x8, scoped, tag = 'scoped memory for tpu_custom_call.1']
    #allocation7 [shape = 'u8[1024]{0}', space=vmem, size = 0x400, scoped, tag = 'output window, operand 0']
    %7 = vsyncpa [#allocation3], 0
    %s8 = scalar_lea.sflag [#allocation3], 1
    %9 = vsyncpa %s8, 0
    %10 = vsyncpa [#allocation6], 0
    %s11 = scalar_lea.sflag [#allocation6], 1
    %12 = vsyncpa %s11, 0
    %13 = vsyncpa [#allocation4], 0
    %s14 = scalar_lea.sflag [#allocation4], 1
    %15 = vsyncpa %s14, 0
    loop: start=0, step=1, limit=4
    $region2: #{tpu_custom_call.1} parent=1 // loop_pre_header
      _
    $region3: #{tpu_custom_call.1} parent=1 // loop_header
      %s17 = sphi 0, %s21
      %p18 = scmp.ge.s32.totalorder %s17, 4
      %s24 = sphi 0, %s43
      %s25 = sphi 0, %s39
      %s26 = sphi 0, %s35
      %s27 = sphi 0, %s24
      %s28 = sphi 0, %s25
      %s29 = sphi 0, %s26
      %s30 = sphi 0, %s27
      %s31 = sphi 0, %s28
      %s32 = sphi 0, %s29
      %s54 = sphi 0, %s56
      %s57 = sphi 0, %s54
      %s58 = sphi 0, %s57
      %s74 = sphi 0, %s58
      %s88 = sphi 0, %s90
      %s91 = sphi 0, %s88
      %s92 = sphi 0, %s91
      %s108 = sphi 0, %s92
      %s116 = sphi 0, %s118
      %s119 = sphi 0, %s116
      %s120 = sphi 0, %s119
      %s136 = sphi 0, %s120
    $region4: #{tpu_custom_call.1} parent=1 // loop_header_branch
      %20 = sbr.rel (%p18) target = $region8
    $region5: #{tpu_custom_call.1} parent=1 // loop_body
      %s22 = ssub.s32 %s17, 1
      %s23 = ssub.s32 %s17, 2
      %s33 = sadd.s32 1, %s26
      %p34 = scmp.ge.s32.totalorder %s33, 1
      %s35 = scalar_select %p34, 0, %s33
      %s36 = sadd.s32 1, %s25
      %s37 = scalar_select %p34, %s36, %s25
      %p38 = scmp.ge.s32.totalorder %s37, 1
      %s39 = scalar_select %p38, 0, %s37
      %s40 = sadd.s32 1, %s24
      %s41 = scalar_select %p38, %s40, %s24
      %p42 = scmp.ge.s32.totalorder %s41, 2
      %s43 = scalar_select %p42, 0, %s41
      %s44 = sadd.s32 %s25, %s26
      %p45 = scmp.lt.s32.totalorder %s44, 0
      %s46 = scalar_select %p45, %s44, 0
      %s47 = sadd.s32 %s39, %s35
      %p48 = scmp.lt.s32.totalorder %s47, 0
      %s49 = scalar_select %p48, %s47, 0
      %s50 = ssub.s32 %s24, %s43
      %s51 = ssub.s32 %s46, %s49
      %s52 = sor.u32 %s50, %s51
      %p53 = scmp.eq.s32.totalorder %s52, 0
      %s55 = sadd.s32 %s54, 1
      %s56 = scalar_select %p53, %s54, %s55
      %p59 = pneg %p53
      %p60 = scmp.eq.s32.totalorder %s17, 1
      %p61 = por %p59, %p60
      %p62 = scmp.ne.s32.totalorder %s54, %s57
      %p63 = scmp.eq.s32.totalorder %s17, 0
      %p64 = por %p62, %p63
      %p65 = scmp.ne.s32.totalorder %s54, %s57
      %p66 = scmp.eq.s32.totalorder %s22, 1
      %p67 = por %p65, %p66
      %p68 = scmp.ne.s32.totalorder %s57, %s58
      %p69 = scmp.eq.s32.totalorder %s22, 0
      %p70 = por %p68, %p69
      %p71 = scmp.ne.s32.totalorder %s57, %s58
      %p72 = scmp.eq.s32.totalorder %s23, 1
      %p73 = por %p71, %p72
      %p75 = scmp.ne.s32.totalorder %s58, %s74
      %p76 = scmp.eq.s32.totalorder %s23, 0
      %p77 = por %p75, %p76
      %s78 = sadd.s32 %s25, %s26
      %p79 = scmp.lt.s32.totalorder %s78, 0
      %s80 = scalar_select %p79, %s78, 0
      %s81 = sadd.s32 %s39, %s35
      %p82 = scmp.lt.s32.totalorder %s81, 0
      %s83 = scalar_select %p82, %s81, 0
      %s84 = ssub.s32 %s24, %s43
      %s85 = ssub.s32 %s80, %s83
      %s86 = sor.u32 %s84, %s85
      %p87 = scmp.eq.s32.totalorder %s86, 0
      %s89 = sadd.s32 %s88, 1
      %s90 = scalar_select %p87, %s88, %s89
      %p93 = pneg %p87
      %p94 = scmp.eq.s32.totalorder %s17, 1
      %p95 = por %p93, %p94
      %p96 = scmp.ne.s32.totalorder %s88, %s91
      %p97 = scmp.eq.s32.totalorder %s17, 0
      %p98 = por %p96, %p97
      %p99 = scmp.ne.s32.totalorder %s88, %s91
      %p100 = scmp.eq.s32.totalorder %s22, 1
      %p101 = por %p99, %p100
      %p102 = scmp.ne.s32.totalorder %s91, %s92
      %p103 = scmp.eq.s32.totalorder %s22, 0
      %p104 = por %p102, %p103
      %p105 = scmp.ne.s32.totalorder %s91, %s92
      %p106 = scmp.eq.s32.totalorder %s23, 1
      %p107 = por %p105, %p106
      %p109 = scmp.ne.s32.totalorder %s92, %s108
      %p110 = scmp.eq.s32.totalorder %s23, 0
      %p111 = por %p109, %p110
      %s112 = sadd.s32 %s24, %s25
      %s113 = sadd.s32 %s43, %s39
      %s114 = ssub.s32 %s112, %s113
      %p115 = scmp.eq.s32.totalorder %s114, 0
      %s117 = sadd.s32 %s116, 1
      %s118 = scalar_select %p115, %s116, %s117
      %p121 = pneg %p115
      %p122 = scmp.eq.s32.totalorder %s17, 1
      %p123 = por %p121, %p122
      %p124 = scmp.ne.s32.totalorder %s116, %s119
      %p125 = scmp.eq.s32.totalorder %s17, 0
      %p126 = por %p124, %p125
      %p127 = scmp.ne.s32.totalorder %s116, %s119
      %p128 = scmp.eq.s32.totalorder %s22, 1
      %p129 = por %p127, %p128
      %p130 = scmp.ne.s32.totalorder %s119, %s120
      %p131 = scmp.eq.s32.totalorder %s22, 0
      %p132 = por %p130, %p131
      %p133 = scmp.ne.s32.totalorder %s119, %s120
      %p134 = scmp.eq.s32.totalorder %s23, 1
      %p135 = por %p133, %p134
      %p137 = scmp.ne.s32.totalorder %s120, %s136
      %p138 = scmp.eq.s32.totalorder %s23, 0
      %p139 = por %p137, %p138
      %p140 = scmp.le.s32.totalorder 1, %s17
      %p141 = scmp.lt.s32.totalorder %s17, 3
      %p142 = pnand %p140, %p141
      %p143 = pneg %p142
      // Predicated region
      $region9: #{tpu_custom_call.1} parent=5 // pred_check
        _
      $region10: #{tpu_custom_call.1} parent=5 // pred_check_branch
        %145 = sbr.rel (%p142) target = $region12
      $region11: #{tpu_custom_call.1} parent=5 // pred_region
        %s146 = ssub.s32 %s17, 1
      $region12: #{tpu_custom_call.1} parent=5 // pred_fallthru
        _
      %p147 = scmp.lt.s32.totalorder %s17, 2
      // Predicated region
      $region13: #{tpu_custom_call.1} parent=5 // pred_check
        %p148 = pneg %p147
      $region14: #{tpu_custom_call.1} parent=5 // pred_check_branch
        %150 = sbr.rel (%p148) target = $region16
      $region15: #{tpu_custom_call.1} parent=5 // pred_region
        // Predicated region
        $region17: #{tpu_custom_call.1} parent=15 // pred_check
          %p151 = pneg %p64
        $region18: #{tpu_custom_call.1} parent=15 // pred_check_branch
          %153 = sbr.rel (%p151) target = $region20
        $region19: #{tpu_custom_call.1} parent=15 // pred_region
          %s154 = sand.u32 %s54, 1
          %s155 = scalar_lea.sflag [#allocation3], %s154
          %s156 = sand.u32 %s54, 1
          %s157 = smul.addr %s156, 8
          %s158 = scalar_lea.vmem [#allocation2], %s157
          %s159 = sadd.s32 %s25, %s26
          %p160 = scmp.lt.s32.totalorder %s159, 0
          %s161 = scalar_select %p160, %s159, 0
          %s162 = smul.u32 2, %s161
          %s164 = ssub.s32 128, 128
          %165 = vsyncadd %s155, %s164
          %s166 = smul.addr %s24, 2
          %s167 = sadd.s32 %s162, %s166
          %s168 = smul.addr %s167, 64
          %s169 = scalar_lea.hbm %s0, %s168
          %s171 = sshll.u32 %s158, 4
          %s172 = int_to_ptr.vmem [resolvable:$true] %s171
          %174 = dma.hbm_to_vmem [thread:$0]  %s169, 128, %s172, %s155
        $region20: #{tpu_custom_call.1} parent=15 // pred_fallthru
          _
        // Predicated region
        $region21: #{tpu_custom_call.1} parent=15 // pred_check
          %p175 = pneg %p98
        $region22: #{tpu_custom_call.1} parent=15 // pred_check_branch
          %177 = sbr.rel (%p175) target = $region24
        $region23: #{tpu_custom_call.1} parent=15 // pred_region
          %s178 = sand.u32 %s88, 1
          %s179 = scalar_lea.sflag [#allocation6], %s178
          %s180 = sand.u32 %s88, 1
          %s181 = smul.addr %s180, 2
          %s182 = scalar_lea.vmem [#allocation5], %s181
          %s183 = sadd.s32 %s25, %s26
          %p184 = scmp.lt.s32.totalorder %s183, 0
          %s185 = scalar_select %p184, %s183, 0
          %s186 = smul.u32 2, %s185
          %s188 = ssub.s32 32, 32
          %189 = vsyncadd %s179, %s188
          %s190 = smul.addr %s24, 2
          %s191 = sadd.s32 %s186, %s190
          %s192 = smul.addr %s191, 16
          %s193 = scalar_lea.hbm %s1, %s192
          %s195 = sshll.u32 %s182, 4
          %s196 = int_to_ptr.vmem [resolvable:$true] %s195
          %198 = dma.hbm_to_vmem [thread:$0]  %s193, 32, %s196, %s179
        $region24: #{tpu_custom_call.1} parent=15 // pred_fallthru
          _
      $region16: #{tpu_custom_call.1} parent=5 // pred_fallthru
        _
      %p199 = scmp.le.s32.totalorder 1, %s17
      %p200 = scmp.lt.s32.totalorder %s17, 3
      %p201 = pnand %p199, %p200
      %p202 = pneg %p201
      // Predicated region
      $region25: #{tpu_custom_call.1} parent=5 // pred_check
        _
      $region26: #{tpu_custom_call.1} parent=5 // pred_check_branch
        %204 = sbr.rel (%p201) target = $region28
      $region27: #{tpu_custom_call.1} parent=5 // pred_region
        %s205 = ssub.s32 %s17, 1
        %s206 = sand.u32 %s57, 1
        %s207 = scalar_lea.sflag [#allocation3], %s206
        %s208 = sand.u32 %s57, 1
        %s209 = smul.addr %s208, 8
        %s210 = scalar_lea.vmem [#allocation2], %s209
        // Predicated region
        $region29: #{tpu_custom_call.1} parent=27 // pred_check
          %p211 = pneg %p70
        $region30: #{tpu_custom_call.1} parent=27 // pred_check_branch
          %213 = sbr.rel (%p211) target = $region32
        $region31: #{tpu_custom_call.1} parent=27 // pred_region
          %214 = dma.done %s207, 128
        $region32: #{tpu_custom_call.1} parent=27 // pred_fallthru
          _
        %s215 = sand.u32 %s91, 1
        %s216 = scalar_lea.sflag [#allocation6], %s215
        %s217 = sand.u32 %s91, 1
        %s218 = smul.addr %s217, 2
        %s219 = scalar_lea.vmem [#allocation5], %s218
        // Predicated region
        $region33: #{tpu_custom_call.1} parent=27 // pred_check
          %p220 = pneg %p104
        $region34: #{tpu_custom_call.1} parent=27 // pred_check_branch
          %222 = sbr.rel (%p220) target = $region36
        $region35: #{tpu_custom_call.1} parent=27 // pred_region
          %223 = dma.done %s216, 32
        $region36: #{tpu_custom_call.1} parent=27 // pred_fallthru
          _
        %s224 = sand.u32 %s57, 1
        %s225 = scalar_lea.sflag [#allocation3], %s224
        %s226 = sand.u32 %s57, 1
        %s227 = smul.addr %s226, 8
        %s228 = scalar_lea.vmem [#allocation2], %s227
        %p229 = pneg %p70
        %p230 = pneg %p67
        %s231 = sand.u32 %s91, 1
        %s232 = scalar_lea.sflag [#allocation6], %s231
        %s233 = sand.u32 %s91, 1
        %s234 = smul.addr %s233, 2
        %s235 = scalar_lea.vmem [#allocation5], %s234
        %p236 = pneg %p104
        %p237 = pneg %p101
        %p238 = pneg %p132
        %p239 = pneg %p129
        %s240 = sand.u32 %s119, 1
        %s241 = scalar_lea.sflag [#allocation4], %s240
        %s242 = sand.u32 %s119, 1
        %s243 = scalar_lea.vmem [#allocation7], %s242
        %s244 = sadd.s32 %s28, %s29
        %p245 = scmp.lt.s32.totalorder %s244, 0
        %s246 = scalar_select %p245, %s244, 0
        %s247 = smul.u32 2, %s246
        %s248 = sadd.s32 %s28, %s29
        %p249 = scmp.lt.s32.totalorder %s248, 0
        %s250 = scalar_select %p249, %s248, 0
        %s251 = smul.u32 2, %s250
        %s252 = sadd.s32 %s27, %s28
        %s253 = sadd.s32 %s28, %s29
        %s254 = smul.u32 %s253, 256
        %s255 = ssub.s32 256, %s254
        %v256 = vlaneseq
        %v257 = vand.u32 %v256, 127
        %v258 = vadd.s32 %v257, 128
        %v259 = vstv %s255
        %vm260 = vcmp.lt.s32.totalorder %v257, %v259
        %vm261 = vcmp.lt.s32.totalorder %v258, %v259
        %v262 = vsel %vm260, 1, 0
        %v263 = vsel %vm261, 1, 0
        %v264 = vcvt.s32.f32 %v262
        %v265 = vcvt.s32.f32 %v263
        %v266 = vld [vmem:[%s210] sm:$0xff]
        %vm267 = vcmp.eq.s32.totalorder %v262, 1
        %vm268 = vcmp.eq.s32.totalorder %v263, 1
        %v270 = vcombine.high %v266, %v266
        %v272 = vsel %vm267, %v266, 0.0
        %v273 = vsel %vm268, %v270, 0.0
        %v274 = vld [vmem:[%s219] sm:$0x3]
        %v275 = vlaneseq
        %v276 = vshrl.u32 %v275, 7
        %v277 = vsub.s32 0, %v276
        %v278 = vrot.slane %v274, %v277
        %v279 = vlaneseq
        %v280 = vshrl.u32 %v279, 7
        %v281 = vsub.s32 1, %v280
        %v282 = vrot.slane %v274, %v281
        %v283 = vsel %vm260, %v278, 0
        %v284 = vsel %vm261, %v282, 0
        %vm285 = vcmp.gt.s32.totalorder %v283, 0
        %v286 = vsel %vm285, %v283, 0
        %vm287 = vcmp.gt.s32.totalorder %v284, 0
        %v288 = vsel %vm287, %v284, 0
        %vm289 = vcmp.lt.s32.totalorder %v286, 3
        %v290 = vsel %vm289, %v286, 3
        %vm291 = vcmp.lt.s32.totalorder %v288, 3
        %v292 = vsel %vm291, %v288, 3
        %v293 = vlaneseq
        %v294 = vshrl.u32 %v293, 7
        %v295 = vlaneseq
        %v296 = vshrl.u32 %v295, 7
        %v297 = vsub.s32 0, %v296
        %v298 = vrot.slane %v290, %v297
        %v299 = vlaneseq
        %v300 = vshrl.u32 %v299, 7
        %v301 = vsub.s32 0, %v300
        %v302 = vrot.slane %v292, %v301
        %vm303 = vcmp.eq.s32.totalorder %v294, %v298
        %vm304 = vcmp.eq.s32.totalorder %v294, %v302
        %vm305 = vmand %vm303, %vm267
        %vm306 = vmand %vm304, %vm268
        %v307 = vsel %vm305, 1, 0
        %v308 = vsel %vm306, 1, 0
        %v309 = vcvt.s32.f32 %v307
        %v310 = vcvt.s32.f32 %v308
        %v313 = vrot.slane %v272, 7
        %v314 = vrot.slane %v273, 7
        %vm317 = vcmp.gt.f32.partialorder %v272, %v313
        %vm318 = vcmp.gt.f32.partialorder %v273, %v314
        %v319 = vsel %vm317, %v272, %v313
        %v320 = vsel %vm318, %v273, %v314
        %v321 = vsel %vm317, 1, 0
        %v322 = vsel %vm318, 1, 0
        %v325 = vrot.slane %v319, 7
        %v326 = vrot.slane %v320, 7
        %vm329 = vcmp.gt.f32.partialorder %v272, %v325
        %vm330 = vcmp.gt.f32.partialorder %v273, %v326
        %v331 = vsel %vm329, %v272, %v325
        %v332 = vsel %vm330, %v273, %v326
        %v333 = vrot.slane %v321, 7
        %v334 = vrot.slane %v322, 7
        %v335 = vsel %vm329, 2, %v333
        %v336 = vsel %vm330, 2, %v334
        %v339 = vrot.slane %v331, 7
        %v340 = vrot.slane %v332, 7
        %vm343 = vcmp.gt.f32.partialorder %v272, %v339
        %vm344 = vcmp.gt.f32.partialorder %v273, %v340
        %v345 = vsel %vm343, %v272, %v339
        %v346 = vsel %vm344, %v273, %v340
        %v347 = vrot.slane %v335, 7
        %v348 = vrot.slane %v336, 7
        %v349 = vsel %vm343, 3, %v347
        %v350 = vsel %vm344, 3, %v348
        %v351 = vlaneseq
        %v352 = vshrl.u32 %v351, 7
        %v353 = vsub.s32 3, %v352
        %v354 = vrot.slane %v349, %v353
        %v355 = vlaneseq
        %v356 = vshrl.u32 %v355, 7
        %v357 = vsub.s32 3, %v356
        %v358 = vrot.slane %v350, %v357
        %vm359 = vcmp.eq.s32.totalorder %v294, %v354
        %vm360 = vcmp.eq.s32.totalorder %v294, %v358
        %vm361 = vmand %vm359, %vm267
        %vm362 = vmand %vm360, %vm268
        %v363 = vsel %vm361, 1, 0
        %v364 = vsel %vm362, 1, 0
        %v365 = vcvt.s32.f32 %v363
        %v366 = vcvt.s32.f32 %v364
        %v367 = vlaneseq
        %v368 = vshrl.u32 %v367, 7
        %v369 = vsub.s32 3, %v368
        %v370 = vrot.slane %v345, %v369
        %v371 = vlaneseq
        %v372 = vshrl.u32 %v371, 7
        %v373 = vsub.s32 3, %v372
        %v374 = vrot.slane %v346, %v373
        %v375 = vsub.f32 %v272, %v370
        %v376 = vsub.f32 %v273, %v374
        %v377 = vmul.f32 %v375, 1.442695
        %v378 = vpow.pop %v377
        %v379 = vmul.f32 %v376, 1.442695
        %v380 = vpow.pop %v379
        %vm381 = vcmask 1043456
        %v382 = vsel %vm381, %v378, 0.0
        %v383 = vrot.slane %v382, 4
        %v384 = vadd.f32 %v382, %v383
        %v385 = vrot.slane %v384, 2
        %v386 = vadd.f32 %v384, %v385
        %v387 = vrot.slane %v386, 1
        %v388 = vadd.f32 %v386, %v387
        %v389 = vsel %vm381, %v380, 0.0
        %v390 = vrot.slane %v389, 4
        %v391 = vadd.f32 %v389, %v390
        %v392 = vrot.slane %v391, 2
        %v393 = vadd.f32 %v391, %v392
        %v394 = vrot.slane %v393, 1
        %v395 = vadd.f32 %v393, %v394
        %v396 = vlog2.pop %v388
        %v397 = vmul.f32 %v396, 0.6931472
        %v398 = vlog2.pop %v395
        %v399 = vmul.f32 %v398, 0.6931472
        %v400 = vadd.f32 %v345, %v397
        %v401 = vadd.f32 %v346, %v399
        %v402 = vmul.f32 %v309, %v272
        %v403 = vmul.f32 %v310, %v273
        %v404 = vsel %vm381, %v402, 0.0
        %v405 = vrot.slane %v404, 4
        %v406 = vadd.f32 %v404, %v405
        %v407 = vrot.slane %v406, 2
        %v408 = vadd.f32 %v406, %v407
        %v409 = vrot.slane %v408, 1
        %v410 = vadd.f32 %v408, %v409
        %v411 = vsel %vm381, %v403, 0.0
        %v412 = vrot.slane %v411, 4
        %v413 = vadd.f32 %v411, %v412
        %v414 = vrot.slane %v413, 2
        %v415 = vadd.f32 %v413, %v414
        %v416 = vrot.slane %v415, 1
        %v417 = vadd.f32 %v415, %v416
        %v418 = vsub.f32 %v400, %v410
        %v419 = vsub.f32 %v401, %v417
        %v420 = vmul.f32 %v418, %v264
        %v421 = vmul.f32 %v419, %v265
        %vm422 = vcmask 1043459
        %v423 = vsel %vm422, %v420, 0.0
        %v424 = vsel %vm422, %v421, 0.0
        %v425 = vadd.f32 %v423, %v424
        %426 = vadd.xlane.f32.xlu0 %v425
        %v427 = vpop.xlane.xlu0 %426
        %v428 = vmul.f32 %v309, %v365
        %v429 = vmul.f32 %v310, %v366
        %v430 = vsel %vm381, %v428, 0.0
        %v431 = vsel %vm381, %v429, 0.0
        %v432 = vadd.f32 %v430, %v431
        %433 = vadd.xlane.f32.xlu0 %v432
        %v434 = vpop.xlane.xlu0 %433
        %v435 = vsel %vm381, %v309, 0.0
        %v436 = vsel %vm381, %v310, 0.0
        %v437 = vadd.f32 %v435, %v436
        %438 = vadd.xlane.f32.xlu0 %v437
        %v439 = vpop.xlane.xlu0 %438
        %v440 = vsel %vm381, %v365, 0.0
        %v441 = vsel %vm381, %v366, 0.0
        %v442 = vadd.f32 %v440, %v441
        %443 = vadd.xlane.f32.xlu0 %v442
        %v444 = vpop.xlane.xlu0 %443
        %vm445 = vcmp.eq.s32.totalorder %v257, 0
        %v446 = vsel %vm445, %v427, 0.0
        %vm447 = vcmp.eq.s32.totalorder %v257, 1
        %v448 = vsel %vm447, %v434, 0.0
        %v450 = vrot.slane %v448, 6
        %v452 = vadd.f32 %v446, %v450
        %vm453 = vcmp.eq.s32.totalorder %v257, 2
        %v454 = vsel %vm453, %v439, 0.0
        %v456 = vrot.slane %v454, 6
        %v458 = vadd.f32 %v452, %v456
        %vm459 = vcmp.eq.s32.totalorder %v257, 3
        %v460 = vsel %vm459, %v444, 0.0
        %v462 = vrot.slane %v460, 6
        %v464 = vadd.f32 %v458, %v462
        %vm465 = vcmp.eq.s32.totalorder %v257, 4
        %v466 = vsel %vm465, %v434, 0.0
        %v468 = vrot.slane %v466, 7
        %v470 = vadd.f32 %v464, %v468
        %vm471 = vcmp.eq.s32.totalorder %v257, 5
        %v472 = vsel %vm471, %v439, 0.0
        %v474 = vrot.slane %v472, 7
        %v476 = vadd.f32 %v470, %v474
        %vm477 = vcmp.eq.s32.totalorder %v257, 6
        %v478 = vsel %vm477, %v444, 0.0
        %v480 = vrot.slane %v478, 7
        %v482 = vadd.f32 %v476, %v480
        %vm483 = vcmp.eq.s32.totalorder %v257, 7
        %v484 = vsel %vm483, %v434, 0.0
        %v485 = vadd.f32 %v482, %v484
        %vm486 = vcmp.eq.s32.totalorder %v257, 8
        %v487 = vsel %vm486, %v439, 0.0
        %v488 = vadd.f32 %v485, %v487
        %vm489 = vcmp.eq.s32.totalorder %v257, 9
        %v490 = vsel %vm489, %v444, 0.0
        %v491 = vadd.f32 %v488, %v490
        %p492 = scmp.eq.s32.totalorder %s29, 0
        // Predicated region
        $region37: #{tpu_custom_call.1} parent=27 // pred_check
          %p493 = pneg %p492
        $region38: #{tpu_custom_call.1} parent=27 // pred_check_branch
          %495 = sbr.rel (%p493) target = $region40
        $region39: #{tpu_custom_call.1} parent=27 // pred_region
          %496 = vst [vmem:[%s243] sm:$0x1] 0.0
        $region40: #{tpu_custom_call.1} parent=27 // pred_fallthru
          _
        %v497 = vld [vmem:[%s243] sm:$0x1]
        %v500 = vunpack.c.l.s4 1966171168
        %v501 = vunpack.c.0.s8 %v500
        %v502 = vlaneseq
        %v503 = vshrl.u32 %v502, 7
        %v504 = vsub.s32 %v501, %v503
        %v505 = vrot.slane %v491, %v504
        %v506 = vcombine.high %v505, %v505
        %v508 = vunpack.c.l.s4 1966171168
        %v509 = vunpack.c.0.s8 %v508
        %v510 = vlaneseq
        %v511 = vshrl.u32 %v510, 7
        %v512 = vsub.s32 %v509, %v511
        %v513 = vrot.slane %v506, %v512
        %v514 = vcombine.high %v513, %v513
        %v516 = vadd.f32 %v497, %v514
        %517 = vst [vmem:[%s243] sm:$0x1] %v516
        %s518 = sand.u32 %s119, 1
        %s519 = scalar_lea.sflag [#allocation4], %s518
        %s520 = sand.u32 %s119, 1
        %s521 = scalar_lea.vmem [#allocation7], %s520
        // Predicated region
        $region41: #{tpu_custom_call.1} parent=27 // pred_check
          %p522 = pneg %p129
        $region42: #{tpu_custom_call.1} parent=27 // pred_check_branch
          %524 = sbr.rel (%p522) target = $region44
        $region43: #{tpu_custom_call.1} parent=27 // pred_region
          %s525 = sadd.s32 %s27, %s28
          %s527 = ssub.s32 16, 16
          %528 = vsyncadd %s519, %s527
          %s529 = smul.addr %s525, 16
          %s530 = scalar_lea.hbm %s2, %s529
          %s532 = sshll.u32 %s521, 4
          %s533 = int_to_ptr.vmem [resolvable:$true] %s532
          %535 = dma.vmem_to_hbm [thread:$0]  %s533, 16, %s530, %s519
        $region44: #{tpu_custom_call.1} parent=27 // pred_fallthru
          _
      $region28: #{tpu_custom_call.1} parent=5 // pred_fallthru
        _
      %p536 = scmp.le.s32.totalorder 2, %s17
      // Predicated region
      $region45: #{tpu_custom_call.1} parent=5 // pred_check
        %p537 = pneg %p536
      $region46: #{tpu_custom_call.1} parent=5 // pred_check_branch
        %539 = sbr.rel (%p537) target = $region48
      $region47: #{tpu_custom_call.1} parent=5 // pred_region
        %s540 = ssub.s32 %s17, 2
        // Predicated region
        $region49: #{tpu_custom_call.1} parent=47 // pred_check
          %p541 = pneg %p135
        $region50: #{tpu_custom_call.1} parent=47 // pred_check_branch
          %543 = sbr.rel (%p541) target = $region52
        $region51: #{tpu_custom_call.1} parent=47 // pred_region
          %s544 = sand.u32 %s120, 1
          %s545 = scalar_lea.sflag [#allocation4], %s544
          %s546 = sand.u32 %s120, 1
          %s547 = scalar_lea.vmem [#allocation7], %s546
          %548 = dma.done %s545, 16
        $region52: #{tpu_custom_call.1} parent=47 // pred_fallthru
          _
      $region48: #{tpu_custom_call.1} parent=5 // pred_fallthru
        _
    $region6: #{tpu_custom_call.1} parent=1 // loop_footer
      %s21 = sadd.s32 1, %s17
    $region7: #{tpu_custom_call.1} parent=1 // loop_footer_branch
      %16 = sbr.rel target = $region3
    $region8: #{tpu_custom_call.1} parent=1 // loop_exit
      _
    %549 = vsyncpa [#allocation3], 1
    %s550 = scalar_lea.sflag [#allocation3], 1
    %551 = vsyncpa %s550, 1
    %552 = vsyncpa [#allocation6], 1
    %s553 = scalar_lea.sflag [#allocation6], 1
    %554 = vsyncpa %s553, 1
    %555 = vsyncpa [#allocation4], 1
    %s556 = scalar_lea.sflag [#allocation4], 1
    %557 = vsyncpa %s556, 1

</llo_original>
